<compile_context>
chip_gen: v5e
topology: v5e:2x2
jax: 0.10.0
libtpu: 0.0.40
codegen_flags: <defaults>
</compile_context>

<pallas_src>
import functools

import jax
import jax.numpy as jnp
from jax import lax
from jax.experimental import pallas as pl
from jax.experimental.pallas import tpu as pltpu

_EPS = 1e-7
_LANES = 128
_SUBLANES = 8
# 2048 x 128 f32 = 1 MiB per float input; (2 f32 + 1 byte-mask) x 2 pipeline
# buffers ~= 4.5 MiB VMEM -> fits v5e/v6e/v7x default scoped VMEM with headroom.
_TARGET_TILE_ROWS = 2048


def _round_up(x, m):
    return ((x + m - 1) // m) * m


def _silog_partial_kernel(est_ref, gt_ref, mask_ref, out_ref, *, rows_total,
                          tile_rows):
    """One grid step: masked per-lane partial sums over a (tile_rows, 128) slab.

    Output block (1, 8, 128):
      sublane 0 = per-lane sum(d), sublane 1 = per-lane sum(d^2),
      sublane 2 = per-lane count, sublanes 3..7 = 0.
    Blocks are independent ("parallel" axis); combined in the wrapper.
    """
    i = pl.program_id(0)
    row0 = i * tile_rows

    # Tail masking: the last block may extend past `rows_total`; OOB block
    # contents are undefined, so gate on the global row index.
    row_ids = row0 + lax.broadcasted_iota(jnp.int32, (tile_rows, _LANES), 0)
    in_bounds = row_ids < rows_total

    m = mask_ref[...]
    if m.dtype != jnp.bool_:        # trace-time branch: mask streamed natively
        m = m != 0
    keep = jnp.logical_and(in_bounds, m)

    # Cast AFTER the VMEM load so bf16 depth maps stream at 2 B/elem.
    # Neutral value 1.0 where not kept: log(1+eps) - log(1+eps) == 0 exactly,
    # so masked-out / OOB elements contribute nothing and cannot inject NaNs
    # (PyTorch indexes with the mask before the log, so they never reach it).
    est = jnp.where(keep, est_ref[...].astype(jnp.float32), 1.0)
    gt = jnp.where(keep, gt_ref[...].astype(jnp.float32), 1.0)

    # Same form as PyTorch: two EUP log pushes per element, no f32 divide.
    d = jnp.log(est + _EPS) - jnp.log(gt + _EPS)

    # Reduce only over rows (sublane axis): mostly VPU vreg adds, no 128-lane
    # cross-lane XLU reduce per grid step.
    sum_d = jnp.sum(d, axis=0, keepdims=True)                        # (1, 128)
    sum_d2 = jnp.sum(d * d, axis=0, keepdims=True)                   # (1, 128)
    cnt = jnp.sum(keep.astype(jnp.float32), axis=0, keepdims=True)   # (1, 128)

    sub = lax.broadcasted_iota(jnp.int32, (_SUBLANES, _LANES), 0)
    out_ref[0] = jnp.where(
        sub == 0, sum_d,
        jnp.where(sub == 1, sum_d2,
                  jnp.where(sub == 2, cnt, 0.0)))


def silog_loss_pallas(depth_est, depth_gt, mask, variance_focus):
    """Pallas TPU version of silog_loss.forward. Returns an f32 scalar."""
    est = jnp.asarray(depth_est).reshape(-1)   # free row-major reshapes,
    gt = jnp.asarray(depth_gt).reshape(-1)     # kept in their native dtype
    msk = jnp.asarray(mask).reshape(-1)        # native bool/uint8 mask stream

    total = est.shape[0]
    pad = (-total) % _LANES
    if pad:
        # Rare ragged case (total % 128 != 0).  Padded elements are inert: the
        # padded mask is False so `keep` drops them before the log.
        # TODO(synk): use 1-D blocks + flat-index masking to avoid this copy.
        est = jnp.pad(est, (0, pad))
        gt = jnp.pad(gt, (0, pad))
        msk = jnp.pad(msk, (0, pad))
    rows = (total + pad) // _LANES

    est = est.reshape(rows, _LANES)
    gt = gt.reshape(rows, _LANES)
    msk = msk.reshape(rows, _LANES)

    # Tile selection: as large as comfortably fits scoped VMEM, rounded to the
    # byte-dtype (32, 128) packing tile.  When more than one block is needed,
    # force an even count and split rows evenly so v7x's two TensorCores get
    # balanced work on the "parallel" grid axis.
    num_blocks = pl.cdiv(rows, _TARGET_TILE_ROWS)
    if num_blocks > 1 and num_blocks % 2:
        num_blocks += 1
    tile_rows = _round_up(pl.cdiv(rows, num_blocks), 32)
    num_blocks = pl.cdiv(rows, tile_rows)

    kernel = functools.partial(_silog_partial_kernel, rows_total=rows,
                               tile_rows=tile_rows)

    elems = rows * _LANES
    in_bytes = elems * (est.dtype.itemsize + gt.dtype.itemsize
                        + msk.dtype.itemsize)
    out_bytes = num_blocks * _SUBLANES * _LANES * 4
    cost = pl.CostEstimate(flops=10 * elems,
                           transcendentals=2 * elems,
                           bytes_accessed=in_bytes + out_bytes)

    partials = pl.pallas_call(
        kernel,
        out_shape=jax.ShapeDtypeStruct((num_blocks, _SUBLANES, _LANES),
                                       jnp.float32),
        grid_spec=pltpu.PrefetchScalarGridSpec(
            num_scalar_prefetch=0,
            grid=(num_blocks,),
            in_specs=[
                pl.BlockSpec((tile_rows, _LANES), lambda i: (i, 0)),
                pl.BlockSpec((tile_rows, _LANES), lambda i: (i, 0)),
                pl.BlockSpec((tile_rows, _LANES), lambda i: (i, 0)),
            ],
            out_specs=pl.BlockSpec((1, _SUBLANES, _LANES),
                                   lambda i: (i, 0, 0)),
        ),
        compiler_params=pltpu.CompilerParams(
            dimension_semantics=("parallel",),  # independent blocks -> megacore
        ),
        cost_estimate=cost,
    )(est, gt, msk)

    # Tiny cross-block / cross-lane combine + final sqrt in plain JAX.
    sum_d = jnp.sum(partials[:, 0, :])
    sum_d2 = jnp.sum(partials[:, 1, :])
    n = jnp.sum(partials[:, 2, :])

    mean_d = sum_d / n
    var_term = sum_d2 / n - variance_focus * mean_d * mean_d
    # No clamp: matches PyTorch exactly (a negative variance term -> NaN, and
    # an all-False mask -> NaN via 0/0, same as the reference).
    return jnp.sqrt(var_term) * 10.0


def silog_loss_ref(depth_est, depth_gt, mask, variance_focus):
    """Pure-JAX reference mirroring the PyTorch forward."""
    m = mask.astype(jnp.float32)
    d = (jnp.log(depth_est.astype(jnp.float32) + _EPS)
         - jnp.log(depth_gt.astype(jnp.float32) + _EPS)) * m
    n = jnp.sum(m)
    mean_d = jnp.sum(d) / n
    mean_d2 = jnp.sum(d * d) / n
    return jnp.sqrt(mean_d2 - variance_focus * mean_d ** 2) * 10.0


if __name__ == "__main__":
    variance_focus = 0.85  # deterministic module "parameter" from __init__

    key = jax.random.PRNGKey(0)
    k1, k2, k3 = jax.random.split(key, 3)

    # Small NCHW depth maps: batch=2, channels=1, spatial=16x16.
    shape = (2, 1, 16, 16)
    depth_est = jax.random.uniform(k1, shape, jnp.float32, minval=0.1, maxval=10.0)
    depth_gt = jax.random.uniform(k2, shape, jnp.float32, minval=0.1, maxval=10.0)
    mask = jax.random.uniform(k3, shape, jnp.float32) > 0.3  # native bool mask

    loss = silog_loss_pallas(depth_est, depth_gt, mask, variance_focus)
    loss = jax.block_until_ready(loss)

    ref = silog_loss_ref(depth_est, depth_gt, mask, variance_focus)
    assert jnp.allclose(loss, ref, rtol=1e-4, atol=1e-5), (loss, ref)

    print("KERNEL_OK")
</pallas_src>

<mosaic_0001>
module attributes {stable_mosaic.version = 11 : i64} {
  func.func @_silog_partial_kernel(%arg0: i32, %arg1: memref<32x128xf32, #tpu.memory_space<vmem>>, %arg2: memref<32x128xf32, #tpu.memory_space<vmem>>, %arg3: memref<32x128xi32, #tpu.memory_space<vmem>>, %arg4: memref<1x8x128xf32, #tpu.memory_space<vmem>>) attributes {dimension_semantics = [#tpu.dimension_semantics<parallel>], iteration_bounds = array<i64: 1>, scalar_prefetch = 0 : i64, scratch_operands = 0 : i64, tpu.core_type = #tpu.core_type<tc>, window_params = [{transform_indices = @transform_0, window_bounds = array<i64: 32, 128>}, {transform_indices = @transform_1, window_bounds = array<i64: 32, 128>}, {transform_indices = @transform_2, window_bounds = array<i64: 32, 128>}, {transform_indices = @transform_3, window_bounds = array<i64: 1, 8, 128>}]} {
    %c32_i32 = arith.constant 32 : i32
    %0 = arith.muli %arg0, %c32_i32 : i32
    %1 = tpu.iota {dimensions = array<i32: 0>} : vector<32x128xi32>
    %2 = vector.broadcast %0 : i32 to vector<32x128xi32>
    %3 = arith.addi %2, %1 : vector<32x128xi32>
    %c4_i32 = arith.constant 4 : i32
    %4 = vector.broadcast %c4_i32 : i32 to vector<32x128xi32>
    %5 = arith.cmpi slt, %3, %4 : vector<32x128xi32>
    %c0 = arith.constant 0 : index
    %c0_0 = arith.constant 0 : index
    %6 = vector.load %arg3[%c0, %c0_0] : memref<32x128xi32, #tpu.memory_space<vmem>>, vector<32x128xi32>
    %cst = arith.constant dense<0> : vector<32x128xi32>
    %7 = arith.cmpi ne, %6, %cst : vector<32x128xi32>
    %8 = arith.andi %5, %7 : vector<32x128xi1>
    %c0_1 = arith.constant 0 : index
    %c0_2 = arith.constant 0 : index
    %9 = vector.load %arg1[%c0_1, %c0_2] : memref<32x128xf32, #tpu.memory_space<vmem>>, vector<32x128xf32>
    %cst_3 = arith.constant 1.000000e+00 : f32
    %10 = vector.broadcast %cst_3 : f32 to vector<32x128xf32>
    %11 = arith.select %8, %9, %10 : vector<32x128xi1>, vector<32x128xf32>
    %c0_4 = arith.constant 0 : index
    %c0_5 = arith.constant 0 : index
    %12 = vector.load %arg2[%c0_4, %c0_5] : memref<32x128xf32, #tpu.memory_space<vmem>>, vector<32x128xf32>
    %cst_6 = arith.constant 1.000000e+00 : f32
    %13 = vector.broadcast %cst_6 : f32 to vector<32x128xf32>
    %14 = arith.select %8, %12, %13 : vector<32x128xi1>, vector<32x128xf32>
    %cst_7 = arith.constant 1.000000e-07 : f32
    %15 = vector.broadcast %cst_7 : f32 to vector<32x128xf32>
    %16 = arith.addf %11, %15 : vector<32x128xf32>
    %17 = math.log %16 : vector<32x128xf32>
    %cst_8 = arith.constant 1.000000e-07 : f32
    %18 = vector.broadcast %cst_8 : f32 to vector<32x128xf32>
    %19 = arith.addf %14, %18 : vector<32x128xf32>
    %20 = math.log %19 : vector<32x128xf32>
    %21 = arith.subf %17, %20 : vector<32x128xf32>
    %cst_9 = arith.constant dense<0.000000e+00> : vector<128xf32>
    %22 = vector.multi_reduction <add>, %21, %cst_9 [0] : vector<32x128xf32> to vector<128xf32>
    %23 = vector.shape_cast %22 : vector<128xf32> to vector<1x128xf32>
    %24 = arith.mulf %21, %21 : vector<32x128xf32>
    %cst_10 = arith.constant dense<0.000000e+00> : vector<128xf32>
    %25 = vector.multi_reduction <add>, %24, %cst_10 [0] : vector<32x128xf32> to vector<128xf32>
    %26 = vector.shape_cast %25 : vector<128xf32> to vector<1x128xf32>
    %27 = arith.extui %8 : vector<32x128xi1> to vector<32x128xi32>
    %28 = arith.sitofp %27 : vector<32x128xi32> to vector<32x128xf32>
    %cst_11 = arith.constant dense<0.000000e+00> : vector<128xf32>
    %29 = vector.multi_reduction <add>, %28, %cst_11 [0] : vector<32x128xf32> to vector<128xf32>
    %30 = vector.shape_cast %29 : vector<128xf32> to vector<1x128xf32>
    %31 = tpu.iota {dimensions = array<i32: 0>} : vector<8x128xi32>
    %c0_i32 = arith.constant 0 : i32
    %32 = vector.broadcast %c0_i32 : i32 to vector<8x128xi32>
    %33 = arith.cmpi eq, %31, %32 : vector<8x128xi32>
    %c1_i32 = arith.constant 1 : i32
    %34 = vector.broadcast %c1_i32 : i32 to vector<8x128xi32>
    %35 = arith.cmpi eq, %31, %34 : vector<8x128xi32>
    %c2_i32 = arith.constant 2 : i32
    %36 = vector.broadcast %c2_i32 : i32 to vector<8x128xi32>
    %37 = arith.cmpi eq, %31, %36 : vector<8x128xi32>
    %cst_12 = arith.constant 0.000000e+00 : f32
    %38 = vector.shape_cast %30 : vector<1x128xf32> to vector<1x128xf32>
    %39 = vector.broadcast %38 : vector<1x128xf32> to vector<8x128xf32>
    %40 = vector.broadcast %cst_12 : f32 to vector<8x128xf32>
    %41 = arith.select %37, %39, %40 : vector<8x128xi1>, vector<8x128xf32>
    %42 = vector.shape_cast %26 : vector<1x128xf32> to vector<1x128xf32>
    %43 = vector.broadcast %42 : vector<1x128xf32> to vector<8x128xf32>
    %44 = arith.select %35, %43, %41 : vector<8x128xi1>, vector<8x128xf32>
    %45 = vector.shape_cast %23 : vector<1x128xf32> to vector<1x128xf32>
    %46 = vector.broadcast %45 : vector<1x128xf32> to vector<8x128xf32>
    %47 = arith.select %33, %46, %44 : vector<8x128xi1>, vector<8x128xf32>
    %c0_13 = arith.constant 0 : index
    %c0_14 = arith.constant 0 : index
    %c0_15 = arith.constant 0 : index
    %48 = vector.load %arg4[%c0_13, %c0_14, %c0_15] : memref<1x8x128xf32, #tpu.memory_space<vmem>>, vector<1x8x128xf32>
    %49 = vector.shape_cast %48 : vector<1x8x128xf32> to vector<8x128xf32>
    %50 = vector.shape_cast %47 : vector<8x128xf32> to vector<1x8x128xf32>
    tpu.vector_store %arg4[%c0_13, %c0_14, %c0_15], %50 {strides = array<i32>} : memref<1x8x128xf32, #tpu.memory_space<vmem>>, vector<1x8x128xf32>,
    return
  }
  func.func @transform_0(%arg0: i32) -> (i32, i32) {
    %c0_i32 = arith.constant 0 : i32
    %c0_i32_0 = arith.constant 0 : i32
    return %arg0, %c0_i32 : i32, i32
  }
  func.func @transform_1(%arg0: i32) -> (i32, i32) {
    %c0_i32 = arith.constant 0 : i32
    %c0_i32_0 = arith.constant 0 : i32
    return %arg0, %c0_i32 : i32, i32
  }
  func.func @transform_2(%arg0: i32) -> (i32, i32) {
    %c0_i32 = arith.constant 0 : i32
    %c0_i32_0 = arith.constant 0 : i32
    return %arg0, %c0_i32 : i32, i32
  }
  func.func @transform_3(%arg0: i32) -> (i32, i32, i32) {
    %c0_i32 = arith.constant 0 : i32
    %c0_i32_0 = arith.constant 0 : i32
    %c0_i32_1 = arith.constant 0 : i32
    return %arg0, %c0_i32, %c0_i32_0 : i32, i32, i32
  }
}

</mosaic_0001>

<llo_original>
// kernel: tpu_custom_call.1
$region0: #{tpu_custom_call.1}
  #allocation0 [shape = 'u32[]', space=smem, size = 0x4, offset = 0x4, fixed_abs, tag = 'smem constant byte address 0x4 - core index']
  #allocation1 [shape = 'u32[72,128]{1,0:T(1,128)}', space=vmem, size = 0x9000, scoped, tag = 'internal scratch']
  %s0 = inlined_call_operand.vmem [shape: f32[4,128], index: 0, kind: input, shape index: {}]
  %s1 = inlined_call_operand.hbm [shape: f32[4,128], index: 1, kind: input, shape index: {}]
  %s2 = inlined_call_operand.vmem [shape: s32[4,128], index: 2, kind: input, shape index: {}]
  %s3 = inlined_call_operand.hbm [shape: f32[1,8,128], index: 3, kind: output, shape index: {}]
  %s4 = sld [smem:[#allocation0]]
  $region26: #{tpu_custom_call.1} parent=0
    _
  %s6 = ssub.s32 1, %s4
  %s7 = scalar_select 0, %s6, %s4
  $region1: #{tpu_custom_call.1} parent=0
    #allocation2 [shape = 'u8[16384]{0}', space=vmem, size = 0x4000, scoped, tag = 'input window, operand 1, single buffered']
    #allocation3 [shape = 's32[1]{0}', space=sflag, size = 0x4, scoped, tag = 'scoped memory for tpu_custom_call.1']
    #allocation4 [shape = 's32[1]{0}', space=sflag, size = 0x4, scoped, tag = 'scoped memory for tpu_custom_call.1']
    #allocation5 [shape = 'u8[4096]{0}', space=vmem, size = 0x1000, scoped, tag = 'output window, operand 0, single buffered']
    %8 = vsyncpa [#allocation3], 0
    %9 = vsyncpa [#allocation4], 0
    // Predicated region
    $region2: #{tpu_custom_call.1} parent=1 // pred_check
      _
    $region3: #{tpu_custom_call.1} parent=1 // pred_check_branch
      %11 = sbr.rel (0) target = $region5
    $region4: #{tpu_custom_call.1} parent=1 // pred_region
      _
    $region5: #{tpu_custom_call.1} parent=1 // pred_fallthru
      _
    // Predicated region
    $region6: #{tpu_custom_call.1} parent=1 // pred_check
      _
    $region7: #{tpu_custom_call.1} parent=1 // pred_check_branch
      %13 = sbr.rel (0) target = $region9
    $region8: #{tpu_custom_call.1} parent=1 // pred_region
      %15 = vsyncadd [#allocation3], 448
      %s16 = sshll.u32 %s1, 4
      %s17 = int_to_ptr.hbm [resolvable:$true] %s16
      %s18 = sshll.u32 [#allocation2], 4
      %s19 = int_to_ptr.vmem [resolvable:$true] %s18
      %24 = dma.hbm_to_vmem [thread:$0]  %s17, 64, %s19, [#allocation3], 64, 64, 4
    $region9: #{tpu_custom_call.1} parent=1 // pred_fallthru
      _
    // Predicated region
    $region10: #{tpu_custom_call.1} parent=1 // pred_check
      _
    $region11: #{tpu_custom_call.1} parent=1 // pred_check_branch
      %26 = sbr.rel (0) target = $region13
    $region12: #{tpu_custom_call.1} parent=1 // pred_region
      _
    $region13: #{tpu_custom_call.1} parent=1 // pred_fallthru
      _
    // Predicated region
    $region14: #{tpu_custom_call.1} parent=1 // pred_check
      _
    $region15: #{tpu_custom_call.1} parent=1 // pred_check_branch
      %28 = sbr.rel (0) target = $region17
    $region16: #{tpu_custom_call.1} parent=1 // pred_region
      %30 = dma.done [#allocation3], 512
    $region17: #{tpu_custom_call.1} parent=1 // pred_fallthru
      _
    %s31 = smul.u32 0, 32
    %v32 = vlaneseq
    %v33 = vshrl.u32 %v32, 7
    %v34 = vadd.s32 %v33, 8
    %v35 = vadd.s32 %v33, 16
    %v36 = vadd.s32 %v33, 24
    %v37 = vstv %s31
    %v38 = vadd.s32 %v37, %v33
    %v39 = vadd.s32 %v37, %v34
    %v40 = vadd.s32 %v37, %v35
    %v41 = vadd.s32 %v37, %v36
    %vm42 = vcmp.lt.s32.totalorder %v38, 4
    %vm43 = vcmp.lt.s32.totalorder %v39, 4
    %vm44 = vcmp.lt.s32.totalorder %v40, 4
    %vm45 = vcmp.lt.s32.totalorder %v41, 4
    %v46 = vld [vmem:[%s2] sm:$0xff]
    %v47 = vld [vmem:[%s2 + $0x8] sm:$0xff]
    %v48 = vld [vmem:[%s2 + $0x10] sm:$0xff]
    %v49 = vld [vmem:[%s2 + $0x18] sm:$0xff]
    %vm50 = vcmp.ne.s32.totalorder %v46, 0
    %vm51 = vcmp.ne.s32.totalorder %v47, 0
    %vm52 = vcmp.ne.s32.totalorder %v48, 0
    %vm53 = vcmp.ne.s32.totalorder %v49, 0
    %vm54 = vmand %vm42, %vm50
    %vm55 = vmand %vm43, %vm51
    %vm56 = vmand %vm44, %vm52
    %vm57 = vmand %vm45, %vm53
    %v58 = vld [vmem:[%s0] sm:$0xff]
    %v59 = vld [vmem:[%s0 + $0x8] sm:$0xff]
    %v60 = vld [vmem:[%s0 + $0x10] sm:$0xff]
    %v61 = vld [vmem:[%s0 + $0x18] sm:$0xff]
    %v62 = vsel %vm54, %v58, 1.0
    %v63 = vsel %vm55, %v59, 1.0
    %v64 = vsel %vm56, %v60, 1.0
    %v65 = vsel %vm57, %v61, 1.0
    %v66 = vld [vmem:[#allocation2] sm:$0xff]
    %v67 = vld [vmem:[#allocation2 + $0x8] sm:$0xff]
    %v68 = vld [vmem:[#allocation2 + $0x10] sm:$0xff]
    %v69 = vld [vmem:[#allocation2 + $0x18] sm:$0xff]
    %v70 = vsel %vm54, %v66, 1.0
    %v71 = vsel %vm55, %v67, 1.0
    %v72 = vsel %vm56, %v68, 1.0
    %v73 = vsel %vm57, %v69, 1.0
    %v74 = vadd.f32 %v62, 1e-07
    %v75 = vadd.f32 %v63, 1e-07
    %v76 = vadd.f32 %v64, 1e-07
    %v77 = vadd.f32 %v65, 1e-07
    %v78 = vlog2.pop %v74
    %v79 = vmul.f32 %v78, 0.6931472
    %v80 = vlog2.pop %v75
    %v81 = vmul.f32 %v80, 0.6931472
    %v82 = vlog2.pop %v76
    %v83 = vmul.f32 %v82, 0.6931472
    %v84 = vlog2.pop %v77
    %v85 = vmul.f32 %v84, 0.6931472
    %v86 = vadd.f32 %v70, 1e-07
    %v87 = vadd.f32 %v71, 1e-07
    %v88 = vadd.f32 %v72, 1e-07
    %v89 = vadd.f32 %v73, 1e-07
    %v90 = vlog2.pop %v86
    %v91 = vmul.f32 %v90, 0.6931472
    %v92 = vlog2.pop %v87
    %v93 = vmul.f32 %v92, 0.6931472
    %v94 = vlog2.pop %v88
    %v95 = vmul.f32 %v94, 0.6931472
    %v96 = vlog2.pop %v89
    %v97 = vmul.f32 %v96, 0.6931472
    %v98 = vsub.f32 %v79, %v91
    %v99 = vsub.f32 %v81, %v93
    %v100 = vsub.f32 %v83, %v95
    %v101 = vsub.f32 %v85, %v97
    %v102 = vadd.f32 %v98, %v99
    %v103 = vadd.f32 %v102, %v100
    %v104 = vadd.f32 %v103, %v101
    %v105 = vrot.slane %v104, 4
    %v106 = vadd.f32 %v104, %v105
    %v107 = vrot.slane %v106, 2
    %v108 = vadd.f32 %v106, %v107
    %v109 = vrot.slane %v108, 1
    %v110 = vadd.f32 %v108, %v109
    %v111 = vmul.f32 %v98, %v98
    %v112 = vmul.f32 %v99, %v99
    %v113 = vmul.f32 %v100, %v100
    %v114 = vmul.f32 %v101, %v101
    %v115 = vadd.f32 %v111, %v112
    %v116 = vadd.f32 %v115, %v113
    %v117 = vadd.f32 %v116, %v114
    %v118 = vrot.slane %v117, 4
    %v119 = vadd.f32 %v117, %v118
    %v120 = vrot.slane %v119, 2
    %v121 = vadd.f32 %v119, %v120
    %v122 = vrot.slane %v121, 1
    %v123 = vadd.f32 %v121, %v122
    %v124 = vsel %vm54, 1, 0
    %v125 = vsel %vm55, 1, 0
    %v126 = vsel %vm56, 1, 0
    %v127 = vsel %vm57, 1, 0
    %v128 = vcvt.s32.f32 %v124
    %v129 = vcvt.s32.f32 %v125
    %v130 = vcvt.s32.f32 %v126
    %v131 = vcvt.s32.f32 %v127
    %v132 = vadd.f32 %v128, %v129
    %v133 = vadd.f32 %v132, %v130
    %v134 = vadd.f32 %v133, %v131
    %v135 = vrot.slane %v134, 4
    %v136 = vadd.f32 %v134, %v135
    %v137 = vrot.slane %v136, 2
    %v138 = vadd.f32 %v136, %v137
    %v139 = vrot.slane %v138, 1
    %v140 = vadd.f32 %v138, %v139
    %vm141 = vcmp.eq.s32.totalorder %v33, 0
    %vm142 = vcmp.eq.s32.totalorder %v33, 1
    %vm143 = vcmp.eq.s32.totalorder %v33, 2
    %v144 = vsel %vm143, %v140, 0.0
    %v145 = vsel %vm142, %v123, %v144
    %v146 = vsel %vm141, %v110, %v145
    %147 = vst [vmem:[#allocation5] sm:$0xff] %v146
    // Predicated region
    $region18: #{tpu_custom_call.1} parent=1 // pred_check
      _
    $region19: #{tpu_custom_call.1} parent=1 // pred_check_branch
      %149 = sbr.rel (0) target = $region21
    $region20: #{tpu_custom_call.1} parent=1 // pred_region
      %151 = vsyncadd [#allocation4], 0
      %s153 = sshll.u32 [#allocation5], 4
      %s154 = int_to_ptr.vmem [resolvable:$true] %s153
      %s155 = sshll.u32 %s3, 4
      %s156 = int_to_ptr.hbm [resolvable:$true] %s155
      %158 = dma.vmem_to_hbm [thread:$0]  %s154, 128, %s156, [#allocation4]
    $region21: #{tpu_custom_call.1} parent=1 // pred_fallthru
      _
    // Predicated region
    $region22: #{tpu_custom_call.1} parent=1 // pred_check
      _
    $region23: #{tpu_custom_call.1} parent=1 // pred_check_branch
      %160 = sbr.rel (0) target = $region25
    $region24: #{tpu_custom_call.1} parent=1 // pred_region
      %162 = dma.done [#allocation4], 128
    $region25: #{tpu_custom_call.1} parent=1 // pred_fallthru
      _
    %163 = vsyncpa [#allocation3], 1
    %164 = vsyncpa [#allocation4], 1

</llo_original>
